<compile_context>
chip_gen: v7x
topology: tpu7x:2x2x1
jax: 0.10.0
libtpu: 0.0.40
codegen_flags: <defaults>
</compile_context>

<pallas_src>
import functools

import jax
import jax.numpy as jnp
from jax.experimental import pallas as pl
from jax.experimental.pallas import tpu as pltpu

EPS = 1e-5
NEG_SLOPE = 0.2
LANE = 128


def _round_up(x, m):
    return (x + m - 1) // m * m


def _pad_to(x, shape):
    return jnp.pad(x, [(0, s - d) for d, s in zip(x.shape, shape)])


# ----------------------------- Pallas kernels ------------------------------ #

def _conv_kernel(p_ref, w_ref, o_ref):
    """One merged matmul: (TM, 9*Cin) bf16 @ (9*Cin, Cout_pad) bf16 -> f32 tile."""
    o_ref[...] = jnp.dot(p_ref[...], w_ref[...], preferred_element_type=jnp.float32)


def _conv_stats_kernel(p_ref, w_ref, o_ref, sum_ref, ssq_ref):
    """Merged-matmul conv tile + per-tile channel sum / sum-of-squares (BN pass 1)."""
    acc = jnp.dot(p_ref[...], w_ref[...], preferred_element_type=jnp.float32)
    o_ref[...] = acc
    sum_ref[...] = jnp.sum(acc, axis=0, keepdims=True).reshape(sum_ref.shape)
    ssq_ref[...] = jnp.sum(acc * acc, axis=0, keepdims=True).reshape(ssq_ref.shape)


def _bn_lrelu_kernel(y_ref, sum_ref, ssq_ref, gamma_ref, beta_ref, o_ref, *, inv_count):
    """BN pass 2: reduce per-tile stats, normalize + gamma/beta + leaky_relu(0.2). All f32."""
    total = jnp.sum(sum_ref[...], axis=0)        # (1, Cp)
    total_sq = jnp.sum(ssq_ref[...], axis=0)     # (1, Cp)
    mean = total * inv_count
    var = jnp.maximum(total_sq * inv_count - mean * mean, 0.0)
    inv_std = jax.lax.rsqrt(var + EPS)
    scale = gamma_ref[...] * inv_std             # (1, Cp)
    shift = beta_ref[...] - mean * scale         # (1, Cp)
    y = y_ref[...] * scale + shift               # (TM, Cp) broadcast
    o_ref[...] = jnp.where(y > 0, y, NEG_SLOPE * y)


# ------------------------------ JAX glue ----------------------------------- #

def _extract_patches(x_nhwc, stride):
    """im2col: pad=1, 3x3. Returns (M, 9*C) patches (tap-major, channel-minor) and (N, Ho, Wo)."""
    n, h, w, c = x_nhwc.shape
    ho = (h - 1) // stride + 1
    wo = (w - 1) // stride + 1
    xp = jnp.pad(x_nhwc, ((0, 0), (1, 1), (1, 1), (0, 0)))
    taps = []
    for dy in range(3):
        for dx in range(3):
            taps.append(xp[:, dy:dy + (ho - 1) * stride + 1:stride,
                              dx:dx + (wo - 1) * stride + 1:stride, :])
    patches = jnp.stack(taps, axis=3).reshape(n * ho * wo, 9 * c)
    return patches, (n, ho, wo)


def _pick_tm(m, k_dim, cp, budget_bytes=16 << 20):
    """Row tile: large enough to pipeline well, small enough for double-buffered VMEM on v7x."""
    tm = 512

    def tile_bytes(t):  # 2x buffered bf16 patches + f32 out tile, plus resident bf16 weights
        return 2 * (t * k_dim * 2 + t * cp * 4) + k_dim * cp * 2

    while tm > 64 and tile_bytes(tm) > budget_bytes:
        tm //= 2
    return min(tm, _round_up(m, 8))


def _compiler_params():
    return pltpu.CompilerParams(
        dimension_semantics=("parallel",),
        vmem_limit_bytes=32 * 1024 * 1024)


def conv3x3(x_nhwc, w_packed, stride=1):
    """w_packed: (9*Cin, Cout) f32. Returns NHWC conv output (no bias)."""
    patches, (n, ho, wo) = _extract_patches(x_nhwc, stride)
    m, k = patches.shape
    cout = w_packed.shape[1]
    cp = _round_up(cout, LANE)
    tm = _pick_tm(m, k, cp)
    mp = _round_up(m, tm)
    nt = mp // tm

    patches_b = _pad_to(patches, (mp, k)).astype(jnp.bfloat16)
    w_b = _pad_to(w_packed, (k, cp)).astype(jnp.bfloat16)

    out = pl.pallas_call(
        _conv_kernel,
        out_shape=jax.ShapeDtypeStruct((mp, cp), jnp.float32),
        grid=(nt,),
        in_specs=[pl.BlockSpec((tm, k), lambda i: (i, 0)),
                  pl.BlockSpec((k, cp), lambda i: (0, 0))],
        out_specs=pl.BlockSpec((tm, cp), lambda i: (i, 0)),
        compiler_params=_compiler_params(),
    )(patches_b, w_b)
    return out[:m, :cout].reshape(n, ho, wo, cout)


def conv3x3_bn_lrelu(x_nhwc, w_packed, gamma, beta):
    """conv3x3 (stride 1) + BatchNorm2d (training-mode batch stats, biased var) + leaky_relu(0.2)."""
    patches, (n, ho, wo) = _extract_patches(x_nhwc, stride=1)
    m, k = patches.shape
    cout = w_packed.shape[1]
    cp = _round_up(cout, LANE)
    tm = _pick_tm(m, k, cp)
    mp = _round_up(m, tm)
    nt = mp // tm

    patches_b = _pad_to(patches, (mp, k)).astype(jnp.bfloat16)
    w_b = _pad_to(w_packed, (k, cp)).astype(jnp.bfloat16)

    conv, psum, pssq = pl.pallas_call(
        _conv_stats_kernel,
        out_shape=(jax.ShapeDtypeStruct((mp, cp), jnp.float32),
                   jax.ShapeDtypeStruct((nt, 1, cp), jnp.float32),
                   jax.ShapeDtypeStruct((nt, 1, cp), jnp.float32)),
        grid=(nt,),
        in_specs=[pl.BlockSpec((tm, k), lambda i: (i, 0)),
                  pl.BlockSpec((k, cp), lambda i: (0, 0))],
        out_specs=(pl.BlockSpec((tm, cp), lambda i: (i, 0)),
                   pl.BlockSpec((1, 1, cp), lambda i: (i, 0, 0)),
                   pl.BlockSpec((1, 1, cp), lambda i: (i, 0, 0))),
        compiler_params=_compiler_params(),
    )(patches_b, w_b)

    gamma_p = _pad_to(gamma.reshape(1, cout), (1, cp))
    beta_p = _pad_to(beta.reshape(1, cout), (1, cp))

    out = pl.pallas_call(
        functools.partial(_bn_lrelu_kernel, inv_count=1.0 / float(m)),
        out_shape=jax.ShapeDtypeStruct((mp, cp), jnp.float32),
        grid=(nt,),
        in_specs=[pl.BlockSpec((tm, cp), lambda i: (i, 0)),
                  pl.BlockSpec((nt, 1, cp), lambda i: (0, 0, 0)),
                  pl.BlockSpec((nt, 1, cp), lambda i: (0, 0, 0)),
                  pl.BlockSpec((1, cp), lambda i: (0, 0)),
                  pl.BlockSpec((1, cp), lambda i: (0, 0))],
        out_specs=pl.BlockSpec((tm, cp), lambda i: (i, 0)),
        compiler_params=_compiler_params(),
    )(conv, psum, pssq, gamma_p, beta_p)

    return out[:m, :cout].reshape(n, ho, wo, cout)


# --------------------------- Module construction --------------------------- #

def _conv_weight(key, cout, cin):
    """PyTorch-style kaiming-uniform init, packed to (9*Cin, Cout) matching the patch layout."""
    fan_in = cin * 9
    bound = float(1.0 / (fan_in ** 0.5))
    w = jax.random.uniform(key, (cout, cin, 3, 3), jnp.float32, -bound, bound)
    # (Cout,Cin,kh,kw) -> (kh,kw,Cin,Cout) -> (9*Cin, Cout): tap-major, channel-minor rows
    return jnp.transpose(w, (2, 3, 1, 0)).reshape(9 * cin, cout)


def init_params(key, input_channel, output_channel):
    k = jax.random.split(key, 4)
    params = {
        "down_w": _conv_weight(k[0], input_channel, input_channel),
        "conv1_w": _conv_weight(k[1], output_channel, input_channel),
        "conv2_w": _conv_weight(k[2], output_channel, output_channel),
        "conv3_w": _conv_weight(k[3], output_channel, output_channel),
    }
    for i in (1, 2, 3):  # BatchNorm2d defaults: weight=1, bias=0
        params[f"bn{i}_gamma"] = jnp.ones((output_channel,), jnp.float32)
        params[f"bn{i}_beta"] = jnp.zeros((output_channel,), jnp.float32)
    return params


@functools.partial(jax.jit, static_argnames=("down_sample",))
def unet_down_block(params, x_nchw, down_sample=True):
    x = jnp.transpose(x_nchw, (0, 2, 3, 1))  # NCHW -> NHWC
    if down_sample:
        x = conv3x3(x, params["down_w"], stride=2)
    x = conv3x3_bn_lrelu(x, params["conv1_w"], params["bn1_gamma"], params["bn1_beta"])
    x = conv3x3_bn_lrelu(x, params["conv2_w"], params["bn2_gamma"], params["bn2_beta"])
    x = conv3x3_bn_lrelu(x, params["conv3_w"], params["bn3_gamma"], params["bn3_beta"])
    return jnp.transpose(x, (0, 3, 1, 2))  # NHWC -> NCHW


# ------------------------------ Reference ---------------------------------- #

def _ref_conv(x_nhwc, w_packed, stride, quantize):
    k9c, cout = w_packed.shape
    cin = k9c // 9
    w = w_packed.reshape(3, 3, cin, cout)
    if quantize:  # mimic the kernel's bf16 MXU operands (f32 accumulation)
        x_nhwc = x_nhwc.astype(jnp.bfloat16).astype(jnp.float32)
        w = w.astype(jnp.bfloat16).astype(jnp.float32)
    return jax.lax.conv_general_dilated(
        x_nhwc, w, (stride, stride), ((1, 1), (1, 1)),
        dimension_numbers=("NHWC", "HWIO", "NHWC"),
        precision=jax.lax.Precision.HIGHEST)


def _ref_block(params, x_nchw, down_sample=True, quantize=False):
    x = jnp.transpose(x_nchw, (0, 2, 3, 1))
    if down_sample:
        x = _ref_conv(x, params["down_w"], 2, quantize)
    for i in (1, 2, 3):
        y = _ref_conv(x, params[f"conv{i}_w"], 1, quantize)
        mean = jnp.mean(y, axis=(0, 1, 2), keepdims=True)
        var = jnp.mean((y - mean) ** 2, axis=(0, 1, 2), keepdims=True)
        y = (y - mean) * jax.lax.rsqrt(var + EPS)
        y = y * params[f"bn{i}_gamma"] + params[f"bn{i}_beta"]
        x = jnp.where(y > 0, y, NEG_SLOPE * y)
    return jnp.transpose(x, (0, 3, 1, 2))


# --------------------------------- Main ------------------------------------ #

if __name__ == "__main__":
    key = jax.random.PRNGKey(0)
    k_param, k_x = jax.random.split(key)

    input_channel, output_channel, down_sample = 4, 8, True
    params = init_params(k_param, input_channel, output_channel)
    x = jax.random.normal(k_x, (2, input_channel, 16, 16), jnp.float32)  # NCHW like PyTorch

    out = jax.block_until_ready(unet_down_block(params, x, down_sample=down_sample))
    assert out.shape == (2, output_channel, 8, 8), out.shape

    # Tight check: reference with identical bf16 rounding of the matmul operands.
    ref_q = jax.block_until_ready(_ref_block(params, x, down_sample, quantize=True))
    assert jnp.allclose(out, ref_q, rtol=2e-3, atol=2e-3), float(jnp.max(jnp.abs(out - ref_q)))

    # Loose check: pure-f32 module semantics (bf16 MXU operands trade a little precision).
    ref = jax.block_until_ready(_ref_block(params, x, down_sample, quantize=False))
    assert jnp.allclose(out, ref, rtol=1e-1, atol=1e-1), float(jnp.max(jnp.abs(out - ref)))

    print("KERNEL_OK")
</pallas_src>

<mosaic_0001>
module attributes {stable_mosaic.version = 11 : i64} {
  func.func @_conv_kernel(%arg0: i32, %arg1: memref<128x36xbf16, #tpu.memory_space<vmem>>, %arg2: memref<36x128xbf16, #tpu.memory_space<vmem>>, %arg3: memref<128x128xf32, #tpu.memory_space<vmem>>) attributes {dimension_semantics = [#tpu.dimension_semantics<parallel>], iteration_bounds = array<i64: 1>, scalar_prefetch = 0 : i64, scratch_operands = 0 : i64, tpu.core_type = #tpu.core_type<tc>, window_params = [{transform_indices = @transform_0, window_bounds = array<i64: 128, 36>}, {pipeline_mode = #tpu.pipeline_mode<synchronous>, transform_indices = @transform_1, window_bounds = array<i64: 36, 128>}, {transform_indices = @transform_2, window_bounds = array<i64: 128, 128>}]} {
    %c0 = arith.constant 0 : index
    %c0_0 = arith.constant 0 : index
    %0 = vector.load %arg1[%c0, %c0_0] : memref<128x36xbf16, #tpu.memory_space<vmem>>, vector<128x36xbf16>
    %c0_1 = arith.constant 0 : index
    %c0_2 = arith.constant 0 : index
    %1 = vector.load %arg2[%c0_1, %c0_2] : memref<36x128xbf16, #tpu.memory_space<vmem>>, vector<36x128xbf16>
    %cst = arith.constant dense<0.000000e+00> : vector<128x128xf32>
    %2 = tpu.matmul %0, %1, %cst {dimension_numbers = #tpu.dot_dimension_numbers<[1], [0], [0], [1], [0, 0, 1, 1], [], []>} : vector<128x36xbf16>, vector<36x128xbf16>, vector<128x128xf32> -> vector<128x128xf32>
    %c0_3 = arith.constant 0 : index
    %c0_4 = arith.constant 0 : index
    %3 = vector.load %arg3[%c0_3, %c0_4] : memref<128x128xf32, #tpu.memory_space<vmem>>, vector<128x128xf32>
    tpu.vector_store %arg3[%c0_3, %c0_4], %2 {strides = array<i32>} : memref<128x128xf32, #tpu.memory_space<vmem>>, vector<128x128xf32>,
    return
  }
  func.func @transform_0(%arg0: i32) -> (i32, i32) {
    %c0_i32 = arith.constant 0 : i32
    %c0_i32_0 = arith.constant 0 : i32
    return %arg0, %c0_i32 : i32, i32
  }
  func.func @transform_1(%arg0: i32) -> (i32, i32) {
    %c0_i32 = arith.constant 0 : i32
    %c0_i32_0 = arith.constant 0 : i32
    %c0_i32_1 = arith.constant 0 : i32
    return %c0_i32, %c0_i32_0 : i32, i32
  }
  func.func @transform_2(%arg0: i32) -> (i32, i32) {
    %c0_i32 = arith.constant 0 : i32
    %c0_i32_0 = arith.constant 0 : i32
    return %arg0, %c0_i32 : i32, i32
  }
}

module attributes {stable_mosaic.version = 11 : i64} {
  func.func @_conv_stats_kernel(%arg0: i32, %arg1: memref<128x36xbf16, #tpu.memory_space<vmem>>, %arg2: memref<36x128xbf16, #tpu.memory_space<vmem>>, %arg3: memref<128x128xf32, #tpu.memory_space<vmem>>, %arg4: memref<1x1x128xf32, #tpu.memory_space<vmem>>, %arg5: memref<1x1x128xf32, #tpu.memory_space<vmem>>) attributes {dimension_semantics = [#tpu.dimension_semantics<parallel>], iteration_bounds = array<i64: 1>, scalar_prefetch = 0 : i64, scratch_operands = 0 : i64, tpu.core_type = #tpu.core_type<tc>, window_params = [{transform_indices = @transform_0, window_bounds = array<i64: 128, 36>}, {pipeline_mode = #tpu.pipeline_mode<synchronous>, transform_indices = @transform_1, window_bounds = array<i64: 36, 128>}, {transform_indices = @transform_2, window_bounds = array<i64: 128, 128>}, {transform_indices = @transform_3, window_bounds = array<i64: 1, 1, 128>}, {transform_indices = @transform_4, window_bounds = array<i64: 1, 1, 128>}]} {
    %c0 = arith.constant 0 : index
    %c0_0 = arith.constant 0 : index
    %0 = vector.load %arg1[%c0, %c0_0] : memref<128x36xbf16, #tpu.memory_space<vmem>>, vector<128x36xbf16>
    %c0_1 = arith.constant 0 : index
    %c0_2 = arith.constant 0 : index
    %1 = vector.load %arg2[%c0_1, %c0_2] : memref<36x128xbf16, #tpu.memory_space<vmem>>, vector<36x128xbf16>
    %cst = arith.constant dense<0.000000e+00> : vector<128x128xf32>
    %2 = tpu.matmul %0, %1, %cst {dimension_numbers = #tpu.dot_dimension_numbers<[1], [0], [0], [1], [0, 0, 1, 1], [], []>} : vector<128x36xbf16>, vector<36x128xbf16>, vector<128x128xf32> -> vector<128x128xf32>
    %c0_3 = arith.constant 0 : index
    %c0_4 = arith.constant 0 : index
    %3 = vector.load %arg3[%c0_3, %c0_4] : memref<128x128xf32, #tpu.memory_space<vmem>>, vector<128x128xf32>
    tpu.vector_store %arg3[%c0_3, %c0_4], %2 {strides = array<i32>} : memref<128x128xf32, #tpu.memory_space<vmem>>, vector<128x128xf32>,
    %cst_5 = arith.constant dense<0.000000e+00> : vector<128xf32>
    %4 = vector.multi_reduction <add>, %2, %cst_5 [0] : vector<128x128xf32> to vector<128xf32>
    %5 = vector.shape_cast %4 : vector<128xf32> to vector<1x128xf32>
    %6 = vector.shape_cast %5 : vector<1x128xf32> to vector<1x1x128xf32>
    %c0_6 = arith.constant 0 : index
    %c0_7 = arith.constant 0 : index
    %c0_8 = arith.constant 0 : index
    %7 = vector.load %arg4[%c0_6, %c0_7, %c0_8] : memref<1x1x128xf32, #tpu.memory_space<vmem>>, vector<1x1x128xf32>
    tpu.vector_store %arg4[%c0_6, %c0_7, %c0_8], %6 {strides = array<i32>} : memref<1x1x128xf32, #tpu.memory_space<vmem>>, vector<1x1x128xf32>,
    %8 = arith.mulf %2, %2 : vector<128x128xf32>
    %cst_9 = arith.constant dense<0.000000e+00> : vector<128xf32>
    %9 = vector.multi_reduction <add>, %8, %cst_9 [0] : vector<128x128xf32> to vector<128xf32>
    %10 = vector.shape_cast %9 : vector<128xf32> to vector<1x128xf32>
    %11 = vector.shape_cast %10 : vector<1x128xf32> to vector<1x1x128xf32>
    %c0_10 = arith.constant 0 : index
    %c0_11 = arith.constant 0 : index
    %c0_12 = arith.constant 0 : index
    %12 = vector.load %arg5[%c0_10, %c0_11, %c0_12] : memref<1x1x128xf32, #tpu.memory_space<vmem>>, vector<1x1x128xf32>
    tpu.vector_store %arg5[%c0_10, %c0_11, %c0_12], %11 {strides = array<i32>} : memref<1x1x128xf32, #tpu.memory_space<vmem>>, vector<1x1x128xf32>,
    return
  }
  func.func @transform_0(%arg0: i32) -> (i32, i32) {
    %c0_i32 = arith.constant 0 : i32
    %c0_i32_0 = arith.constant 0 : i32
    return %arg0, %c0_i32 : i32, i32
  }
  func.func @transform_1(%arg0: i32) -> (i32, i32) {
    %c0_i32 = arith.constant 0 : i32
    %c0_i32_0 = arith.constant 0 : i32
    %c0_i32_1 = arith.constant 0 : i32
    return %c0_i32, %c0_i32_0 : i32, i32
  }
  func.func @transform_2(%arg0: i32) -> (i32, i32) {
    %c0_i32 = arith.constant 0 : i32
    %c0_i32_0 = arith.constant 0 : i32
    return %arg0, %c0_i32 : i32, i32
  }
  func.func @transform_3(%arg0: i32) -> (i32, i32, i32) {
    %c0_i32 = arith.constant 0 : i32
    %c0_i32_0 = arith.constant 0 : i32
    %c0_i32_1 = arith.constant 0 : i32
    return %arg0, %c0_i32, %c0_i32_0 : i32, i32, i32
  }
  func.func @transform_4(%arg0: i32) -> (i32, i32, i32) {
    %c0_i32 = arith.constant 0 : i32
    %c0_i32_0 = arith.constant 0 : i32
    %c0_i32_1 = arith.constant 0 : i32
    return %arg0, %c0_i32, %c0_i32_0 : i32, i32, i32
  }
}

module attributes {stable_mosaic.version = 11 : i64} {
  func.func @_bn_lrelu_kernel(%arg0: i32, %arg1: memref<128x128xf32, #tpu.memory_space<vmem>>, %arg2: memref<1x1x128xf32, #tpu.memory_space<vmem>>, %arg3: memref<1x1x128xf32, #tpu.memory_space<vmem>>, %arg4: memref<1x128xf32, #tpu.memory_space<vmem>>, %arg5: memref<1x128xf32, #tpu.memory_space<vmem>>, %arg6: memref<128x128xf32, #tpu.memory_space<vmem>>) attributes {dimension_semantics = [#tpu.dimension_semantics<parallel>], iteration_bounds = array<i64: 1>, scalar_prefetch = 0 : i64, scratch_operands = 0 : i64, tpu.core_type = #tpu.core_type<tc>, window_params = [{transform_indices = @transform_0, window_bounds = array<i64: 128, 128>}, {pipeline_mode = #tpu.pipeline_mode<synchronous>, transform_indices = @transform_1, window_bounds = array<i64: 1, 1, 128>}, {pipeline_mode = #tpu.pipeline_mode<synchronous>, transform_indices = @transform_2, window_bounds = array<i64: 1, 1, 128>}, {pipeline_mode = #tpu.pipeline_mode<synchronous>, transform_indices = @transform_3, window_bounds = array<i64: 1, 128>}, {pipeline_mode = #tpu.pipeline_mode<synchronous>, transform_indices = @transform_4, window_bounds = array<i64: 1, 128>}, {transform_indices = @transform_5, window_bounds = array<i64: 128, 128>}]} {
    %c0 = arith.constant 0 : index
    %c0_0 = arith.constant 0 : index
    %c0_1 = arith.constant 0 : index
    %0 = vector.load %arg2[%c0, %c0_0, %c0_1] : memref<1x1x128xf32, #tpu.memory_space<vmem>>, vector<1x1x128xf32>
    %cst = arith.constant dense<0.000000e+00> : vector<1x128xf32>
    %1 = vector.multi_reduction <add>, %0, %cst [0] : vector<1x1x128xf32> to vector<1x128xf32>
    %c0_2 = arith.constant 0 : index
    %c0_3 = arith.constant 0 : index
    %c0_4 = arith.constant 0 : index
    %2 = vector.load %arg3[%c0_2, %c0_3, %c0_4] : memref<1x1x128xf32, #tpu.memory_space<vmem>>, vector<1x1x128xf32>
    %cst_5 = arith.constant dense<0.000000e+00> : vector<1x128xf32>
    %3 = vector.multi_reduction <add>, %2, %cst_5 [0] : vector<1x1x128xf32> to vector<1x128xf32>
    %cst_6 = arith.constant 7.812500e-03 : f32
    %4 = vector.broadcast %cst_6 : f32 to vector<1x128xf32>
    %5 = arith.mulf %1, %4 : vector<1x128xf32>
    %cst_7 = arith.constant 7.812500e-03 : f32
    %6 = vector.broadcast %cst_7 : f32 to vector<1x128xf32>
    %7 = arith.mulf %3, %6 : vector<1x128xf32>
    %8 = arith.mulf %5, %5 : vector<1x128xf32>
    %9 = arith.subf %7, %8 : vector<1x128xf32>
    %cst_8 = arith.constant 0.000000e+00 : f32
    %10 = vector.broadcast %cst_8 : f32 to vector<1x128xf32>
    %11 = arith.maximumf %9, %10 : vector<1x128xf32>
    %cst_9 = arith.constant 9.99999974E-6 : f32
    %12 = vector.broadcast %cst_9 : f32 to vector<1x128xf32>
    %13 = arith.addf %11, %12 : vector<1x128xf32>
    %14 = math.rsqrt %13 : vector<1x128xf32>
    %c0_10 = arith.constant 0 : index
    %c0_11 = arith.constant 0 : index
    %15 = vector.load %arg4[%c0_10, %c0_11] : memref<1x128xf32, #tpu.memory_space<vmem>>, vector<1x128xf32>
    %16 = arith.mulf %15, %14 : vector<1x128xf32>
    %c0_12 = arith.constant 0 : index
    %c0_13 = arith.constant 0 : index
    %17 = vector.load %arg5[%c0_12, %c0_13] : memref<1x128xf32, #tpu.memory_space<vmem>>, vector<1x128xf32>
    %18 = arith.mulf %5, %16 : vector<1x128xf32>
    %19 = arith.subf %17, %18 : vector<1x128xf32>
    %c0_14 = arith.constant 0 : index
    %c0_15 = arith.constant 0 : index
    %20 = vector.load %arg1[%c0_14, %c0_15] : memref<128x128xf32, #tpu.memory_space<vmem>>, vector<128x128xf32>
    %21 = vector.broadcast %16 : vector<1x128xf32> to vector<128x128xf32>
    %22 = arith.mulf %20, %21 : vector<128x128xf32>
    %23 = vector.broadcast %19 : vector<1x128xf32> to vector<128x128xf32>
    %24 = arith.addf %22, %23 : vector<128x128xf32>
    %cst_16 = arith.constant 0.000000e+00 : f32
    %25 = vector.broadcast %cst_16 : f32 to vector<128x128xf32>
    %26 = arith.cmpf ogt, %24, %25 : vector<128x128xf32>
    %cst_17 = arith.constant 2.000000e-01 : f32
    %27 = vector.broadcast %cst_17 : f32 to vector<128x128xf32>
    %28 = arith.mulf %27, %24 : vector<128x128xf32>
    %29 = arith.select %26, %24, %28 : vector<128x128xi1>, vector<128x128xf32>
    %c0_18 = arith.constant 0 : index
    %c0_19 = arith.constant 0 : index
    %30 = vector.load %arg6[%c0_18, %c0_19] : memref<128x128xf32, #tpu.memory_space<vmem>>, vector<128x128xf32>
    tpu.vector_store %arg6[%c0_18, %c0_19], %29 {strides = array<i32>} : memref<128x128xf32, #tpu.memory_space<vmem>>, vector<128x128xf32>,
    return
  }
  func.func @transform_0(%arg0: i32) -> (i32, i32) {
    %c0_i32 = arith.constant 0 : i32
    %c0_i32_0 = arith.constant 0 : i32
    return %arg0, %c0_i32 : i32, i32
  }
  func.func @transform_1(%arg0: i32) -> (i32, i32, i32) {
    %c0_i32 = arith.constant 0 : i32
    %c0_i32_0 = arith.constant 0 : i32
    %c0_i32_1 = arith.constant 0 : i32
    %c0_i32_2 = arith.constant 0 : i32
    return %c0_i32, %c0_i32_0, %c0_i32_1 : i32, i32, i32
  }
  func.func @transform_2(%arg0: i32) -> (i32, i32, i32) {
    %c0_i32 = arith.constant 0 : i32
    %c0_i32_0 = arith.constant 0 : i32
    %c0_i32_1 = arith.constant 0 : i32
    %c0_i32_2 = arith.constant 0 : i32
    return %c0_i32, %c0_i32_0, %c0_i32_1 : i32, i32, i32
  }
  func.func @transform_3(%arg0: i32) -> (i32, i32) {
    %c0_i32 = arith.constant 0 : i32
    %c0_i32_0 = arith.constant 0 : i32
    %c0_i32_1 = arith.constant 0 : i32
    return %c0_i32, %c0_i32_0 : i32, i32
  }
  func.func @transform_4(%arg0: i32) -> (i32, i32) {
    %c0_i32 = arith.constant 0 : i32
    %c0_i32_0 = arith.constant 0 : i32
    %c0_i32_1 = arith.constant 0 : i32
    return %c0_i32, %c0_i32_0 : i32, i32
  }
  func.func @transform_5(%arg0: i32) -> (i32, i32) {
    %c0_i32 = arith.constant 0 : i32
    %c0_i32_0 = arith.constant 0 : i32
    return %arg0, %c0_i32 : i32, i32
  }
}

module attributes {stable_mosaic.version = 11 : i64} {
  func.func @_conv_stats_kernel(%arg0: i32, %arg1: memref<128x72xbf16, #tpu.memory_space<vmem>>, %arg2: memref<72x128xbf16, #tpu.memory_space<vmem>>, %arg3: memref<128x128xf32, #tpu.memory_space<vmem>>, %arg4: memref<1x1x128xf32, #tpu.memory_space<vmem>>, %arg5: memref<1x1x128xf32, #tpu.memory_space<vmem>>) attributes {dimension_semantics = [#tpu.dimension_semantics<parallel>], iteration_bounds = array<i64: 1>, scalar_prefetch = 0 : i64, scratch_operands = 0 : i64, tpu.core_type = #tpu.core_type<tc>, window_params = [{transform_indices = @transform_0, window_bounds = array<i64: 128, 72>}, {pipeline_mode = #tpu.pipeline_mode<synchronous>, transform_indices = @transform_1, window_bounds = array<i64: 72, 128>}, {transform_indices = @transform_2, window_bounds = array<i64: 128, 128>}, {transform_indices = @transform_3, window_bounds = array<i64: 1, 1, 128>}, {transform_indices = @transform_4, window_bounds = array<i64: 1, 1, 128>}]} {
    %c0 = arith.constant 0 : index
    %c0_0 = arith.constant 0 : index
    %0 = vector.load %arg1[%c0, %c0_0] : memref<128x72xbf16, #tpu.memory_space<vmem>>, vector<128x72xbf16>
    %c0_1 = arith.constant 0 : index
    %c0_2 = arith.constant 0 : index
    %1 = vector.load %arg2[%c0_1, %c0_2] : memref<72x128xbf16, #tpu.memory_space<vmem>>, vector<72x128xbf16>
    %cst = arith.constant dense<0.000000e+00> : vector<128x128xf32>
    %2 = tpu.matmul %0, %1, %cst {dimension_numbers = #tpu.dot_dimension_numbers<[1], [0], [0], [1], [0, 0, 1, 1], [], []>} : vector<128x72xbf16>, vector<72x128xbf16>, vector<128x128xf32> -> vector<128x128xf32>
    %c0_3 = arith.constant 0 : index
    %c0_4 = arith.constant 0 : index
    %3 = vector.load %arg3[%c0_3, %c0_4] : memref<128x128xf32, #tpu.memory_space<vmem>>, vector<128x128xf32>
    tpu.vector_store %arg3[%c0_3, %c0_4], %2 {strides = array<i32>} : memref<128x128xf32, #tpu.memory_space<vmem>>, vector<128x128xf32>,
    %cst_5 = arith.constant dense<0.000000e+00> : vector<128xf32>
    %4 = vector.multi_reduction <add>, %2, %cst_5 [0] : vector<128x128xf32> to vector<128xf32>
    %5 = vector.shape_cast %4 : vector<128xf32> to vector<1x128xf32>
    %6 = vector.shape_cast %5 : vector<1x128xf32> to vector<1x1x128xf32>
    %c0_6 = arith.constant 0 : index
    %c0_7 = arith.constant 0 : index
    %c0_8 = arith.constant 0 : index
    %7 = vector.load %arg4[%c0_6, %c0_7, %c0_8] : memref<1x1x128xf32, #tpu.memory_space<vmem>>, vector<1x1x128xf32>
    tpu.vector_store %arg4[%c0_6, %c0_7, %c0_8], %6 {strides = array<i32>} : memref<1x1x128xf32, #tpu.memory_space<vmem>>, vector<1x1x128xf32>,
    %8 = arith.mulf %2, %2 : vector<128x128xf32>
    %cst_9 = arith.constant dense<0.000000e+00> : vector<128xf32>
    %9 = vector.multi_reduction <add>, %8, %cst_9 [0] : vector<128x128xf32> to vector<128xf32>
    %10 = vector.shape_cast %9 : vector<128xf32> to vector<1x128xf32>
    %11 = vector.shape_cast %10 : vector<1x128xf32> to vector<1x1x128xf32>
    %c0_10 = arith.constant 0 : index
    %c0_11 = arith.constant 0 : index
    %c0_12 = arith.constant 0 : index
    %12 = vector.load %arg5[%c0_10, %c0_11, %c0_12] : memref<1x1x128xf32, #tpu.memory_space<vmem>>, vector<1x1x128xf32>
    tpu.vector_store %arg5[%c0_10, %c0_11, %c0_12], %11 {strides = array<i32>} : memref<1x1x128xf32, #tpu.memory_space<vmem>>, vector<1x1x128xf32>,
    return
  }
  func.func @transform_0(%arg0: i32) -> (i32, i32) {
    %c0_i32 = arith.constant 0 : i32
    %c0_i32_0 = arith.constant 0 : i32
    return %arg0, %c0_i32 : i32, i32
  }
  func.func @transform_1(%arg0: i32) -> (i32, i32) {
    %c0_i32 = arith.constant 0 : i32
    %c0_i32_0 = arith.constant 0 : i32
    %c0_i32_1 = arith.constant 0 : i32
    return %c0_i32, %c0_i32_0 : i32, i32
  }
  func.func @transform_2(%arg0: i32) -> (i32, i32) {
    %c0_i32 = arith.constant 0 : i32
    %c0_i32_0 = arith.constant 0 : i32
    return %arg0, %c0_i32 : i32, i32
  }
  func.func @transform_3(%arg0: i32) -> (i32, i32, i32) {
    %c0_i32 = arith.constant 0 : i32
    %c0_i32_0 = arith.constant 0 : i32
    %c0_i32_1 = arith.constant 0 : i32
    return %arg0, %c0_i32, %c0_i32_0 : i32, i32, i32
  }
  func.func @transform_4(%arg0: i32) -> (i32, i32, i32) {
    %c0_i32 = arith.constant 0 : i32
    %c0_i32_0 = arith.constant 0 : i32
    %c0_i32_1 = arith.constant 0 : i32
    return %arg0, %c0_i32, %c0_i32_0 : i32, i32, i32
  }
}

</mosaic_0001>

<llo_original>
// kernel: unet_down_block.7
$region0: #{unet_down_block.7}
  #allocation0 [shape = 'u32[]', space=smem, size = 0x4, offset = 0x4, fixed_abs, tag = 'smem constant byte address 0x4 - core index']
  #allocation1 [shape = 'u32[144,128]{1,0:T(1,128)}', space=vmem, size = 0x12000, scoped, tag = 'internal scratch']
  %s0 = inlined_call_operand.vmem [shape: bf16[128,36], index: 0, kind: input, shape index: {}]
  %s1 = inlined_call_operand.vmem [shape: bf16[36,128], index: 1, kind: input, shape index: {}]
  %s2 = inlined_call_operand.vmem [shape: f32[128,128], index: 2, kind: output, shape index: {}]
  %s3 = sld [smem:[#allocation0]]
  $region18: #{unet_down_block.7} parent=0
    _
  %s5 = ssub.s32 1, %s3
  %s6 = scalar_select 0, %s5, %s3
  // Predicated region
  $region2: #{unet_down_block.7} parent=0 // pred_check
    _
  $region3: #{unet_down_block.7} parent=0 // pred_check_branch
    %8 = sbr.rel (0) target = $region5
  $region4: #{unet_down_block.7} parent=0 // pred_region
    _
  $region5: #{unet_down_block.7} parent=0 // pred_fallthru
    _
  // Predicated region
  $region6: #{unet_down_block.7} parent=0 // pred_check
    _
  $region7: #{unet_down_block.7} parent=0 // pred_check_branch
    %10 = sbr.rel (0) target = $region9
  $region8: #{unet_down_block.7} parent=0 // pred_region
    _
  $region9: #{unet_down_block.7} parent=0 // pred_fallthru
    _
  %v12 = vld [vmem:[%s0] sm:$0xf]
  %v13 = vld [vmem:[%s0 + $0x4] sm:$0xf]
  %v14 = vld [vmem:[%s0 + $0x8] sm:$0xf]
  %v15 = vld [vmem:[%s0 + $0xc] sm:$0xf]
  %v16 = vld [vmem:[%s0 + $0x10] sm:$0xf]
  %v17 = vld [vmem:[%s0 + $0x14] sm:$0xf]
  %v18 = vld [vmem:[%s0 + $0x18] sm:$0xf]
  %v19 = vld [vmem:[%s0 + $0x1c] sm:$0xf]
  %v20 = vld [vmem:[%s0 + $0x20] sm:$0xf]
  %v21 = vld [vmem:[%s0 + $0x24] sm:$0xf]
  %v22 = vld [vmem:[%s0 + $0x28] sm:$0xf]
  %v23 = vld [vmem:[%s0 + $0x2c] sm:$0xf]
  %v24 = vld [vmem:[%s0 + $0x30] sm:$0xf]
  %v25 = vld [vmem:[%s0 + $0x34] sm:$0xf]
  %v26 = vld [vmem:[%s0 + $0x38] sm:$0xf]
  %v27 = vld [vmem:[%s0 + $0x3c] sm:$0xf]
  %v28 = vld [vmem:[%s1] sm:$0xf]
  %v29 = vld [vmem:[%s1 + $0x4] sm:$0xf]
  %v30 = vld [vmem:[%s1 + $0x8] sm:$0xf]
  %v31 = vld [vmem:[%s1 + $0xc] sm:$0xf]
  %v32 = vld [vmem:[%s1 + $0x10] sm:$0x3]
  %v49 = vunpack.c.l.b16 %v12
  %v50 = vunpack.c.l.b16 %v13
  %v51 = vunpack.c.l.b16 %v14
  %v52 = vunpack.c.l.b16 %v15
  %v53 = vunpack.c.l.b16 %v16
  %v54 = vunpack.c.l.b16 %v17
  %v55 = vunpack.c.l.b16 %v18
  %v56 = vunpack.c.l.b16 %v19
  %v57 = vunpack.c.l.b16 %v20
  %v58 = vunpack.c.l.b16 %v21
  %v59 = vunpack.c.l.b16 %v22
  %v60 = vunpack.c.l.b16 %v23
  %v61 = vunpack.c.l.b16 %v24
  %v62 = vunpack.c.l.b16 %v25
  %v63 = vunpack.c.l.b16 %v26
  %v64 = vunpack.c.l.b16 %v27
  %v65 = vpack.c.b16 %v50, %v49
  %v66 = vpack.c.b16 %v52, %v51
  %v67 = vpack.c.b16 %v54, %v53
  %v68 = vpack.c.b16 %v56, %v55
  %v69 = vpack.c.b16 %v58, %v57
  %v70 = vpack.c.b16 %v60, %v59
  %v71 = vpack.c.b16 %v62, %v61
  %v72 = vpack.c.b16 %v64, %v63
  %v78 = vunpack.c.l.b16 %v28
  %v79 = vunpack.c.l.b16 %v29
  %v80 = vunpack.c.l.b16 %v30
  %v81 = vunpack.c.l.b16 %v31
  %v82 = vunpack.c.l.b16 %v32
  %v83 = vpack.c.b16 %v79, %v78
  %v84 = vpack.c.b16 %v81, %v80
  %v85 = vpack.c.b16 %v82, %v82
  %vm88 = vcmask 293888
  %v90 = vsel %vm88, %v65, 0
  %v93 = vsel %vm88, %v66, 0
  %v96 = vsel %vm88, %v67, 0
  %v99 = vsel %vm88, %v68, 0
  %v102 = vsel %vm88, %v69, 0
  %v105 = vsel %vm88, %v70, 0
  %v108 = vsel %vm88, %v71, 0
  %v111 = vsel %vm88, %v72, 0
  %vm113 = vcmask 1041408
  %v115 = vsel %vm113, %v85, 0
  %117 = vmatprep.subr.bf16.mxu0 0
  %118 = vmatpush1.bf16.msra.mxu0 %v83
  %119 = vmatprep.subr.bf16.mxu0 0
  %120 = vmatpush1.bf16.msra.mxu0 %v84
  %121 = vmatprep.subr.bf16.mxu0 0
  %122 = vmatpush1.bf16.msra.mxu0 %v115
  %123 = vmatprep.subr.bf16.mxu0 0
  %124 = vmatpush1.bf16.msra.mxu0 0
  %125 = vmatprep.subr.bf16.mxu0 0
  %126 = vmatpush1.bf16.msra.mxu0 0
  %127 = vmatprep.subr.bf16.mxu0 0
  %128 = vmatpush1.bf16.msra.mxu0 0
  %129 = vmatprep.subr.bf16.mxu0 0
  %130 = vmatpush1.bf16.msra.mxu0 0
  %131 = vmatprep.subr.bf16.mxu0 0
  %132 = vmatpush1.bf16.msra.mxu0 0
  %133 = vmatprep.subr.bf16.mxu0 0
  %134 = vmatpush1.bf16.msra.mxu0 0
  %135 = vmatprep.subr.bf16.mxu0 0
  %136 = vmatpush1.bf16.msra.mxu0 0
  %137 = vmatprep.subr.bf16.mxu0 0
  %138 = vmatpush1.bf16.msra.mxu0 0
  %139 = vmatprep.subr.bf16.mxu0 0
  %140 = vmatpush1.bf16.msra.mxu0 0
  %141 = vmatprep.subr.bf16.mxu0 0
  %142 = vmatpush1.bf16.msra.mxu0 0
  %143 = vmatprep.subr.bf16.mxu0 0
  %144 = vmatpush1.bf16.msra.mxu0 0
  %145 = vmatprep.subr.bf16.mxu0 0
  %146 = vmatpush1.bf16.msra.mxu0 0
  %147 = vmatprep.subr.bf16.mxu0 0
  %148 = vmatpush1.bf16.msra.mxu0 0
  %149 = vmatprep.mubr.bf16.mxu0 0
  %150 = vmatmul.mubr.bf16.gmra.mrb[0].mxu0 %v90
  %v151 = vpop.f32.mrb[0].mxu0
  %v152 = vadd.f32 0.0, %v151
  %v153 = vpop.f32.mrb[0].mxu0
  %v154 = vpop.f32.mrb[0].mxu0
  %v155 = vadd.f32 0.0, %v154
  %v156 = vpop.f32.mrb[0].mxu0
  %157 = vmatprep.mubr.bf16.mxu0 0
  %158 = vmatmul.mubr.bf16.gmra.mrb[0].mxu0 %v93
  %v159 = vpop.f32.mrb[0].mxu0
  %v160 = vadd.f32 0.0, %v159
  %v161 = vpop.f32.mrb[0].mxu0
  %v162 = vpop.f32.mrb[0].mxu0
  %v163 = vadd.f32 0.0, %v162
  %v164 = vpop.f32.mrb[0].mxu0
  %165 = vmatprep.mubr.bf16.mxu0 0
  %166 = vmatmul.mubr.bf16.gmra.mrb[0].mxu0 %v96
  %v167 = vpop.f32.mrb[0].mxu0
  %v168 = vadd.f32 0.0, %v167
  %v169 = vpop.f32.mrb[0].mxu0
  %v170 = vpop.f32.mrb[0].mxu0
  %v171 = vadd.f32 0.0, %v170
  %v172 = vpop.f32.mrb[0].mxu0
  %173 = vmatprep.mubr.bf16.mxu0 0
  %174 = vmatmul.mubr.bf16.gmra.mrb[0].mxu0 %v99
  %v175 = vpop.f32.mrb[0].mxu0
  %v176 = vadd.f32 0.0, %v175
  %v177 = vpop.f32.mrb[0].mxu0
  %v178 = vpop.f32.mrb[0].mxu0
  %v179 = vadd.f32 0.0, %v178
  %v180 = vpop.f32.mrb[0].mxu0
  %181 = vmatprep.mubr.bf16.mxu0 0
  %182 = vmatmul.mubr.bf16.gmra.mrb[0].mxu0 %v102
  %v183 = vpop.f32.mrb[0].mxu0
  %v184 = vadd.f32 0.0, %v183
  %v185 = vpop.f32.mrb[0].mxu0
  %v186 = vpop.f32.mrb[0].mxu0
  %v187 = vadd.f32 0.0, %v186
  %v188 = vpop.f32.mrb[0].mxu0
  %189 = vmatprep.mubr.bf16.mxu0 0
  %190 = vmatmul.mubr.bf16.gmra.mrb[0].mxu0 %v105
  %v191 = vpop.f32.mrb[0].mxu0
  %v192 = vadd.f32 0.0, %v191
  %v193 = vpop.f32.mrb[0].mxu0
  %v194 = vpop.f32.mrb[0].mxu0
  %v195 = vadd.f32 0.0, %v194
  %v196 = vpop.f32.mrb[0].mxu0
  %197 = vmatprep.mubr.bf16.mxu0 0
  %198 = vmatmul.mubr.bf16.gmra.mrb[0].mxu0 %v108
  %v199 = vpop.f32.mrb[0].mxu0
  %v200 = vadd.f32 0.0, %v199
  %v201 = vpop.f32.mrb[0].mxu0
  %v202 = vpop.f32.mrb[0].mxu0
  %v203 = vadd.f32 0.0, %v202
  %v204 = vpop.f32.mrb[0].mxu0
  %205 = vmatprep.mubr.bf16.mxu0 0
  %206 = vmatmul.mubr.bf16.gmra.mrb[0].mxu0 %v111
  %v207 = vpop.f32.mrb[0].mxu0
  %v208 = vadd.f32 0.0, %v207
  %v209 = vpop.f32.mrb[0].mxu0
  %v210 = vpop.f32.mrb[0].mxu0
  %v211 = vadd.f32 0.0, %v210
  %v212 = vpop.f32.mrb[0].mxu0
  %213 = vdwg.mxu0
  %214 = vst [vmem:[%s2] sm:$0xff] %v152
  %215 = vst [vmem:[%s2 + $0x8] sm:$0xff] %v155
  %216 = vst [vmem:[%s2 + $0x10] sm:$0xff] %v160
  %217 = vst [vmem:[%s2 + $0x18] sm:$0xff] %v163
  %218 = vst [vmem:[%s2 + $0x20] sm:$0xff] %v168
  %219 = vst [vmem:[%s2 + $0x28] sm:$0xff] %v171
  %220 = vst [vmem:[%s2 + $0x30] sm:$0xff] %v176
  %221 = vst [vmem:[%s2 + $0x38] sm:$0xff] %v179
  %222 = vst [vmem:[%s2 + $0x40] sm:$0xff] %v184
  %223 = vst [vmem:[%s2 + $0x48] sm:$0xff] %v187
  %224 = vst [vmem:[%s2 + $0x50] sm:$0xff] %v192
  %225 = vst [vmem:[%s2 + $0x58] sm:$0xff] %v195
  %226 = vst [vmem:[%s2 + $0x60] sm:$0xff] %v200
  %227 = vst [vmem:[%s2 + $0x68] sm:$0xff] %v203
  %228 = vst [vmem:[%s2 + $0x70] sm:$0xff] %v208
  %229 = vst [vmem:[%s2 + $0x78] sm:$0xff] %v211
  // Predicated region
  $region10: #{unet_down_block.7} parent=0 // pred_check
    _
  $region11: #{unet_down_block.7} parent=0 // pred_check_branch
    %231 = sbr.rel (0) target = $region13
  $region12: #{unet_down_block.7} parent=0 // pred_region
    _
  $region13: #{unet_down_block.7} parent=0 // pred_fallthru
    _
  // Predicated region
  $region14: #{unet_down_block.7} parent=0 // pred_check
    _
  $region15: #{unet_down_block.7} parent=0 // pred_check_branch
    %233 = sbr.rel (0) target = $region17
  $region16: #{unet_down_block.7} parent=0 // pred_region
    _
  $region17: #{unet_down_block.7} parent=0 // pred_fallthru
    _

// kernel: unet_down_block.8
$region0: #{unet_down_block.8}
  #allocation0 [shape = 'u32[]', space=smem, size = 0x4, offset = 0x4, fixed_abs, tag = 'smem constant byte address 0x4 - core index']
  #allocation1 [shape = 'u32[144,128]{1,0:T(1,128)}', space=vmem, size = 0x12000, scoped, tag = 'internal scratch']
  %s0 = inlined_call_operand.vmem [shape: bf16[128,36], index: 0, kind: input, shape index: {}]
  %s1 = inlined_call_operand.vmem [shape: bf16[36,128], index: 1, kind: input, shape index: {}]
  %s2 = inlined_call_operand.vmem [shape: f32[128,128], index: 2, kind: output, shape index: {0}]
  %s3 = inlined_call_operand.vmem [shape: f32[1,1,128], index: 3, kind: output, shape index: {1}]
  %s4 = inlined_call_operand.vmem [shape: f32[1,1,128], index: 4, kind: output, shape index: {2}]
  %5 = xla_tuple %s2, %s3, %s4
  %s6 = sld [smem:[#allocation0]]
  $region34: #{unet_down_block.8} parent=0
    _
  %s8 = ssub.s32 1, %s6
  %s9 = scalar_select 0, %s8, %s6
  // Predicated region
  $region2: #{unet_down_block.8} parent=0 // pred_check
    _
  $region3: #{unet_down_block.8} parent=0 // pred_check_branch
    %11 = sbr.rel (0) target = $region5
  $region4: #{unet_down_block.8} parent=0 // pred_region
    _
  $region5: #{unet_down_block.8} parent=0 // pred_fallthru
    _
  // Predicated region
  $region6: #{unet_down_block.8} parent=0 // pred_check
    _
  $region7: #{unet_down_block.8} parent=0 // pred_check_branch
    %13 = sbr.rel (0) target = $region9
  $region8: #{unet_down_block.8} parent=0 // pred_region
    _
  $region9: #{unet_down_block.8} parent=0 // pred_fallthru
    _
  %v15 = vld [vmem:[%s0] sm:$0xf]
  %v16 = vld [vmem:[%s0 + $0x4] sm:$0xf]
  %v17 = vld [vmem:[%s0 + $0x8] sm:$0xf]
  %v18 = vld [vmem:[%s0 + $0xc] sm:$0xf]
  %v19 = vld [vmem:[%s0 + $0x10] sm:$0xf]
  %v20 = vld [vmem:[%s0 + $0x14] sm:$0xf]
  %v21 = vld [vmem:[%s0 + $0x18] sm:$0xf]
  %v22 = vld [vmem:[%s0 + $0x1c] sm:$0xf]
  %v23 = vld [vmem:[%s0 + $0x20] sm:$0xf]
  %v24 = vld [vmem:[%s0 + $0x24] sm:$0xf]
  %v25 = vld [vmem:[%s0 + $0x28] sm:$0xf]
  %v26 = vld [vmem:[%s0 + $0x2c] sm:$0xf]
  %v27 = vld [vmem:[%s0 + $0x30] sm:$0xf]
  %v28 = vld [vmem:[%s0 + $0x34] sm:$0xf]
  %v29 = vld [vmem:[%s0 + $0x38] sm:$0xf]
  %v30 = vld [vmem:[%s0 + $0x3c] sm:$0xf]
  %v31 = vld [vmem:[%s1] sm:$0xf]
  %v32 = vld [vmem:[%s1 + $0x4] sm:$0xf]
  %v33 = vld [vmem:[%s1 + $0x8] sm:$0xf]
  %v34 = vld [vmem:[%s1 + $0xc] sm:$0xf]
  %v35 = vld [vmem:[%s1 + $0x10] sm:$0x3]
  %v52 = vunpack.c.l.b16 %v15
  %v53 = vunpack.c.l.b16 %v16
  %v54 = vunpack.c.l.b16 %v17
  %v55 = vunpack.c.l.b16 %v18
  %v56 = vunpack.c.l.b16 %v19
  %v57 = vunpack.c.l.b16 %v20
  %v58 = vunpack.c.l.b16 %v21
  %v59 = vunpack.c.l.b16 %v22
  %v60 = vunpack.c.l.b16 %v23
  %v61 = vunpack.c.l.b16 %v24
  %v62 = vunpack.c.l.b16 %v25
  %v63 = vunpack.c.l.b16 %v26
  %v64 = vunpack.c.l.b16 %v27
  %v65 = vunpack.c.l.b16 %v28
  %v66 = vunpack.c.l.b16 %v29
  %v67 = vunpack.c.l.b16 %v30
  %v68 = vpack.c.b16 %v53, %v52
  %v69 = vpack.c.b16 %v55, %v54
  %v70 = vpack.c.b16 %v57, %v56
  %v71 = vpack.c.b16 %v59, %v58
  %v72 = vpack.c.b16 %v61, %v60
  %v73 = vpack.c.b16 %v63, %v62
  %v74 = vpack.c.b16 %v65, %v64
  %v75 = vpack.c.b16 %v67, %v66
  %v81 = vunpack.c.l.b16 %v31
  %v82 = vunpack.c.l.b16 %v32
  %v83 = vunpack.c.l.b16 %v33
  %v84 = vunpack.c.l.b16 %v34
  %v85 = vunpack.c.l.b16 %v35
  %v86 = vpack.c.b16 %v82, %v81
  %v87 = vpack.c.b16 %v84, %v83
  %v88 = vpack.c.b16 %v85, %v85
  %vm91 = vcmask 293888
  %v93 = vsel %vm91, %v68, 0
  %v96 = vsel %vm91, %v69, 0
  %v99 = vsel %vm91, %v70, 0
  %v102 = vsel %vm91, %v71, 0
  %v105 = vsel %vm91, %v72, 0
  %v108 = vsel %vm91, %v73, 0
  %v111 = vsel %vm91, %v74, 0
  %v114 = vsel %vm91, %v75, 0
  %vm116 = vcmask 1041408
  %v118 = vsel %vm116, %v88, 0
  %120 = vmatprep.subr.bf16.mxu0 0
  %121 = vmatpush1.bf16.msra.mxu0 %v86
  %122 = vmatprep.subr.bf16.mxu0 0
  %123 = vmatpush1.bf16.msra.mxu0 %v87
  %124 = vmatprep.subr.bf16.mxu0 0
  %125 = vmatpush1.bf16.msra.mxu0 %v118
  %126 = vmatprep.subr.bf16.mxu0 0
  %127 = vmatpush1.bf16.msra.mxu0 0
  %128 = vmatprep.subr.bf16.mxu0 0
  %129 = vmatpush1.bf16.msra.mxu0 0
  %130 = vmatprep.subr.bf16.mxu0 0
  %131 = vmatpush1.bf16.msra.mxu0 0
  %132 = vmatprep.subr.bf16.mxu0 0
  %133 = vmatpush1.bf16.msra.mxu0 0
  %134 = vmatprep.subr.bf16.mxu0 0
  %135 = vmatpush1.bf16.msra.mxu0 0
  %136 = vmatprep.subr.bf16.mxu0 0
  %137 = vmatpush1.bf16.msra.mxu0 0
  %138 = vmatprep.subr.bf16.mxu0 0
  %139 = vmatpush1.bf16.msra.mxu0 0
  %140 = vmatprep.subr.bf16.mxu0 0
  %141 = vmatpush1.bf16.msra.mxu0 0
  %142 = vmatprep.subr.bf16.mxu0 0
  %143 = vmatpush1.bf16.msra.mxu0 0
  %144 = vmatprep.subr.bf16.mxu0 0
  %145 = vmatpush1.bf16.msra.mxu0 0
  %146 = vmatprep.subr.bf16.mxu0 0
  %147 = vmatpush1.bf16.msra.mxu0 0
  %148 = vmatprep.subr.bf16.mxu0 0
  %149 = vmatpush1.bf16.msra.mxu0 0
  %150 = vmatprep.subr.bf16.mxu0 0
  %151 = vmatpush1.bf16.msra.mxu0 0
  %152 = vmatprep.mubr.bf16.mxu0 0
  %153 = vmatmul.mubr.bf16.gmra.mrb[0].mxu0 %v93
  %v154 = vpop.f32.mrb[0].mxu0
  %v155 = vadd.f32 0.0, %v154
  %v156 = vpop.f32.mrb[0].mxu0
  %v157 = vpop.f32.mrb[0].mxu0
  %v158 = vadd.f32 0.0, %v157
  %v159 = vpop.f32.mrb[0].mxu0
  %160 = vmatprep.mubr.bf16.mxu0 0
  %161 = vmatmul.mubr.bf16.gmra.mrb[0].mxu0 %v96
  %v162 = vpop.f32.mrb[0].mxu0
  %v163 = vadd.f32 0.0, %v162
  %v164 = vpop.f32.mrb[0].mxu0
  %v165 = vpop.f32.mrb[0].mxu0
  %v166 = vadd.f32 0.0, %v165
  %v167 = vpop.f32.mrb[0].mxu0
  %168 = vmatprep.mubr.bf16.mxu0 0
  %169 = vmatmul.mubr.bf16.gmra.mrb[0].mxu0 %v99
  %v170 = vpop.f32.mrb[0].mxu0
  %v171 = vadd.f32 0.0, %v170
  %v172 = vpop.f32.mrb[0].mxu0
  %v173 = vpop.f32.mrb[0].mxu0
  %v174 = vadd.f32 0.0, %v173
  %v175 = vpop.f32.mrb[0].mxu0
  %176 = vmatprep.mubr.bf16.mxu0 0
  %177 = vmatmul.mubr.bf16.gmra.mrb[0].mxu0 %v102
  %v178 = vpop.f32.mrb[0].mxu0
  %v179 = vadd.f32 0.0, %v178
  %v180 = vpop.f32.mrb[0].mxu0
  %v181 = vpop.f32.mrb[0].mxu0
  %v182 = vadd.f32 0.0, %v181
  %v183 = vpop.f32.mrb[0].mxu0
  %184 = vmatprep.mubr.bf16.mxu0 0
  %185 = vmatmul.mubr.bf16.gmra.mrb[0].mxu0 %v105
  %v186 = vpop.f32.mrb[0].mxu0
  %v187 = vadd.f32 0.0, %v186
  %v188 = vpop.f32.mrb[0].mxu0
  %v189 = vpop.f32.mrb[0].mxu0
  %v190 = vadd.f32 0.0, %v189
  %v191 = vpop.f32.mrb[0].mxu0
  %192 = vmatprep.mubr.bf16.mxu0 0
  %193 = vmatmul.mubr.bf16.gmra.mrb[0].mxu0 %v108
  %v194 = vpop.f32.mrb[0].mxu0
  %v195 = vadd.f32 0.0, %v194
  %v196 = vpop.f32.mrb[0].mxu0
  %v197 = vpop.f32.mrb[0].mxu0
  %v198 = vadd.f32 0.0, %v197
  %v199 = vpop.f32.mrb[0].mxu0
  %200 = vmatprep.mubr.bf16.mxu0 0
  %201 = vmatmul.mubr.bf16.gmra.mrb[0].mxu0 %v111
  %v202 = vpop.f32.mrb[0].mxu0
  %v203 = vadd.f32 0.0, %v202
  %v204 = vpop.f32.mrb[0].mxu0
  %v205 = vpop.f32.mrb[0].mxu0
  %v206 = vadd.f32 0.0, %v205
  %v207 = vpop.f32.mrb[0].mxu0
  %208 = vmatprep.mubr.bf16.mxu0 0
  %209 = vmatmul.mubr.bf16.gmra.mrb[0].mxu0 %v114
  %v210 = vpop.f32.mrb[0].mxu0
  %v211 = vadd.f32 0.0, %v210
  %v212 = vpop.f32.mrb[0].mxu0
  %v213 = vpop.f32.mrb[0].mxu0
  %v214 = vadd.f32 0.0, %v213
  %v215 = vpop.f32.mrb[0].mxu0
  %216 = vdwg.mxu0
  %217 = vst [vmem:[%s2] sm:$0xff] %v155
  %218 = vst [vmem:[%s2 + $0x8] sm:$0xff] %v158
  %219 = vst [vmem:[%s2 + $0x10] sm:$0xff] %v163
  %220 = vst [vmem:[%s2 + $0x18] sm:$0xff] %v166
  %221 = vst [vmem:[%s2 + $0x20] sm:$0xff] %v171
  %222 = vst [vmem:[%s2 + $0x28] sm:$0xff] %v174
  %223 = vst [vmem:[%s2 + $0x30] sm:$0xff] %v179
  %224 = vst [vmem:[%s2 + $0x38] sm:$0xff] %v182
  %225 = vst [vmem:[%s2 + $0x40] sm:$0xff] %v187
  %226 = vst [vmem:[%s2 + $0x48] sm:$0xff] %v190
  %227 = vst [vmem:[%s2 + $0x50] sm:$0xff] %v195
  %228 = vst [vmem:[%s2 + $0x58] sm:$0xff] %v198
  %229 = vst [vmem:[%s2 + $0x60] sm:$0xff] %v203
  %230 = vst [vmem:[%s2 + $0x68] sm:$0xff] %v206
  %231 = vst [vmem:[%s2 + $0x70] sm:$0xff] %v211
  %232 = vst [vmem:[%s2 + $0x78] sm:$0xff] %v214
  %v233 = vadd.f32 %v155, %v158
  %v234 = vadd.f32 %v233, %v163
  %v235 = vadd.f32 %v234, %v166
  %v236 = vadd.f32 %v235, %v171
  %v237 = vadd.f32 %v236, %v174
  %v238 = vadd.f32 %v237, %v179
  %v239 = vadd.f32 %v238, %v182
  %v240 = vadd.f32 %v239, %v187
  %v241 = vadd.f32 %v240, %v190
  %v242 = vadd.f32 %v241, %v195
  %v243 = vadd.f32 %v242, %v198
  %v244 = vadd.f32 %v243, %v203
  %v245 = vadd.f32 %v244, %v206
  %v246 = vadd.f32 %v245, %v211
  %v247 = vadd.f32 %v246, %v214
  %v248 = vrot.slane %v247, 4
  %v249 = vadd.f32 %v247, %v248
  %v250 = vrot.slane %v249, 2
  %v251 = vadd.f32 %v249, %v250
  %v252 = vrot.slane %v251, 1
  %v253 = vadd.f32 %v251, %v252
  %254 = vst [vmem:[%s3] sm:$0x1] %v253
  %v255 = vmul.f32 %v155, %v155
  %v256 = vmul.f32 %v158, %v158
  %v257 = vmul.f32 %v163, %v163
  %v258 = vmul.f32 %v166, %v166
  %v259 = vmul.f32 %v171, %v171
  %v260 = vmul.f32 %v174, %v174
  %v261 = vmul.f32 %v179, %v179
  %v262 = vmul.f32 %v182, %v182
  %v263 = vmul.f32 %v187, %v187
  %v264 = vmul.f32 %v190, %v190
  %v265 = vmul.f32 %v195, %v195
  %v266 = vmul.f32 %v198, %v198
  %v267 = vmul.f32 %v203, %v203
  %v268 = vmul.f32 %v206, %v206
  %v269 = vmul.f32 %v211, %v211
  %v270 = vmul.f32 %v214, %v214
  %v271 = vadd.f32 %v255, %v256
  %v272 = vadd.f32 %v271, %v257
  %v273 = vadd.f32 %v272, %v258
  %v274 = vadd.f32 %v273, %v259
  %v275 = vadd.f32 %v274, %v260
  %v276 = vadd.f32 %v275, %v261
  %v277 = vadd.f32 %v276, %v262
  %v278 = vadd.f32 %v277, %v263
  %v279 = vadd.f32 %v278, %v264
  %v280 = vadd.f32 %v279, %v265
  %v281 = vadd.f32 %v280, %v266
  %v282 = vadd.f32 %v281, %v267
  %v283 = vadd.f32 %v282, %v268
  %v284 = vadd.f32 %v283, %v269
  %v285 = vadd.f32 %v284, %v270
  %v286 = vrot.slane %v285, 4
  %v287 = vadd.f32 %v285, %v286
  %v288 = vrot.slane %v287, 2
  %v289 = vadd.f32 %v287, %v288
  %v290 = vrot.slane %v289, 1
  %v291 = vadd.f32 %v289, %v290
  %292 = vst [vmem:[%s4] sm:$0x1] %v291
  // Predicated region
  $region10: #{unet_down_block.8} parent=0 // pred_check
    _
  $region11: #{unet_down_block.8} parent=0 // pred_check_branch
    %294 = sbr.rel (0) target = $region13
  $region12: #{unet_down_block.8} parent=0 // pred_region
    _
  $region13: #{unet_down_block.8} parent=0 // pred_fallthru
    _
  // Predicated region
  $region14: #{unet_down_block.8} parent=0 // pred_check
    _
  $region15: #{unet_down_block.8} parent=0 // pred_check_branch
    %296 = sbr.rel (0) target = $region17
  $region16: #{unet_down_block.8} parent=0 // pred_region
    _
  $region17: #{unet_down_block.8} parent=0 // pred_fallthru
    _
  // Predicated region
  $region18: #{unet_down_block.8} parent=0 // pred_check
    _
  $region19: #{unet_down_block.8} parent=0 // pred_check_branch
    %298 = sbr.rel (0) target = $region21
  $region20: #{unet_down_block.8} parent=0 // pred_region
    _
  $region21: #{unet_down_block.8} parent=0 // pred_fallthru
    _
  // Predicated region
  $region22: #{unet_down_block.8} parent=0 // pred_check
    _
  $region23: #{unet_down_block.8} parent=0 // pred_check_branch
    %300 = sbr.rel (0) target = $region25
  $region24: #{unet_down_block.8} parent=0 // pred_region
    _
  $region25: #{unet_down_block.8} parent=0 // pred_fallthru
    _
  // Predicated region
  $region26: #{unet_down_block.8} parent=0 // pred_check
    _
  $region27: #{unet_down_block.8} parent=0 // pred_check_branch
    %302 = sbr.rel (0) target = $region29
  $region28: #{unet_down_block.8} parent=0 // pred_region
    _
  $region29: #{unet_down_block.8} parent=0 // pred_fallthru
    _
  // Predicated region
  $region30: #{unet_down_block.8} parent=0 // pred_check
    _
  $region31: #{unet_down_block.8} parent=0 // pred_check_branch
    %304 = sbr.rel (0) target = $region33
  $region32: #{unet_down_block.8} parent=0 // pred_region
    _
  $region33: #{unet_down_block.8} parent=0 // pred_fallthru
    _

// kernel: unet_down_block.9
$region0: #{unet_down_block.9}
  #allocation0 [shape = 'u32[]', space=smem, size = 0x4, offset = 0x4, fixed_abs, tag = 'smem constant byte address 0x4 - core index']
  #allocation1 [shape = 'u32[144,128]{1,0:T(1,128)}', space=vmem, size = 0x12000, scoped, tag = 'internal scratch']
  %s0 = inlined_call_operand.vmem [shape: f32[128,128], index: 0, kind: input, shape index: {}]
  %s1 = inlined_call_operand.vmem [shape: f32[1,1,128], index: 1, kind: input, shape index: {}]
  %s2 = inlined_call_operand.vmem [shape: f32[1,1,128], index: 2, kind: input, shape index: {}]
  %s3 = inlined_call_operand.vmem [shape: f32[1,128], index: 3, kind: input, shape index: {}]
  %s4 = inlined_call_operand.vmem [shape: f32[1,128], index: 4, kind: input, shape index: {}]
  %s5 = inlined_call_operand.vmem [shape: f32[128,128], index: 5, kind: output, shape index: {}]
  %s6 = sld [smem:[#allocation0]]
  $region30: #{unet_down_block.9} parent=0
    _
  %s8 = ssub.s32 1, %s6
  %s9 = scalar_select 0, %s8, %s6
  // Predicated region
  $region2: #{unet_down_block.9} parent=0 // pred_check
    _
  $region3: #{unet_down_block.9} parent=0 // pred_check_branch
    %11 = sbr.rel (0) target = $region5
  $region4: #{unet_down_block.9} parent=0 // pred_region
    _
  $region5: #{unet_down_block.9} parent=0 // pred_fallthru
    _
  // Predicated region
  $region6: #{unet_down_block.9} parent=0 // pred_check
    _
  $region7: #{unet_down_block.9} parent=0 // pred_check_branch
    %13 = sbr.rel (0) target = $region9
  $region8: #{unet_down_block.9} parent=0 // pred_region
    _
  $region9: #{unet_down_block.9} parent=0 // pred_fallthru
    _
  // Predicated region
  $region10: #{unet_down_block.9} parent=0 // pred_check
    _
  $region11: #{unet_down_block.9} parent=0 // pred_check_branch
    %15 = sbr.rel (0) target = $region13
  $region12: #{unet_down_block.9} parent=0 // pred_region
    _
  $region13: #{unet_down_block.9} parent=0 // pred_fallthru
    _
  // Predicated region
  $region14: #{unet_down_block.9} parent=0 // pred_check
    _
  $region15: #{unet_down_block.9} parent=0 // pred_check_branch
    %17 = sbr.rel (0) target = $region17
  $region16: #{unet_down_block.9} parent=0 // pred_region
    _
  $region17: #{unet_down_block.9} parent=0 // pred_fallthru
    _
  // Predicated region
  $region18: #{unet_down_block.9} parent=0 // pred_check
    _
  $region19: #{unet_down_block.9} parent=0 // pred_check_branch
    %19 = sbr.rel (0) target = $region21
  $region20: #{unet_down_block.9} parent=0 // pred_region
    _
  $region21: #{unet_down_block.9} parent=0 // pred_fallthru
    _
  %v20 = vld [vmem:[%s1] sm:$0x1]
  %v21 = vadd.f32 %v20, 0.0
  %v22 = vld [vmem:[%s2] sm:$0x1]
  %v23 = vadd.f32 %v22, 0.0
  %v24 = vmul.f32 %v21, 0.0078125
  %v25 = vmul.f32 %v23, 0.0078125
  %v26 = vmul.f32 %v24, %v24
  %v27 = vsub.f32 %v25, %v26
  %v28 = vmax.f32 %v27, 0.0
  %v29 = vadd.f32 %v28, 1e-05
  %v30 = vrsqrt.pop %v29
  %v31 = vld [vmem:[%s3] sm:$0x1]
  %v32 = vmul.f32 %v31, %v30
  %v33 = vld [vmem:[%s4] sm:$0x1]
  %v34 = vmul.f32 %v24, %v32
  %v35 = vsub.f32 %v33, %v34
  %v36 = vld [vmem:[%s0] sm:$0xff]
  %v37 = vld [vmem:[%s0 + $0x8] sm:$0xff]
  %v38 = vld [vmem:[%s0 + $0x10] sm:$0xff]
  %v39 = vld [vmem:[%s0 + $0x18] sm:$0xff]
  %v40 = vld [vmem:[%s0 + $0x20] sm:$0xff]
  %v41 = vld [vmem:[%s0 + $0x28] sm:$0xff]
  %v42 = vld [vmem:[%s0 + $0x30] sm:$0xff]
  %v43 = vld [vmem:[%s0 + $0x38] sm:$0xff]
  %v44 = vld [vmem:[%s0 + $0x40] sm:$0xff]
  %v45 = vld [vmem:[%s0 + $0x48] sm:$0xff]
  %v46 = vld [vmem:[%s0 + $0x50] sm:$0xff]
  %v47 = vld [vmem:[%s0 + $0x58] sm:$0xff]
  %v48 = vld [vmem:[%s0 + $0x60] sm:$0xff]
  %v49 = vld [vmem:[%s0 + $0x68] sm:$0xff]
  %v50 = vld [vmem:[%s0 + $0x70] sm:$0xff]
  %v51 = vld [vmem:[%s0 + $0x78] sm:$0xff]
  %v53 = vlaneseq
  %v54 = vshrl.u32 %v53, 7
  %v55 = vsub.s32 0, %v54
  %v56 = vrot.slane %v32, %v55
  %v58 = vmul.f32 %v36, %v56
  %v59 = vmul.f32 %v37, %v56
  %v60 = vmul.f32 %v38, %v56
  %v61 = vmul.f32 %v39, %v56
  %v62 = vmul.f32 %v40, %v56
  %v63 = vmul.f32 %v41, %v56
  %v64 = vmul.f32 %v42, %v56
  %v65 = vmul.f32 %v43, %v56
  %v66 = vmul.f32 %v44, %v56
  %v67 = vmul.f32 %v45, %v56
  %v68 = vmul.f32 %v46, %v56
  %v69 = vmul.f32 %v47, %v56
  %v70 = vmul.f32 %v48, %v56
  %v71 = vmul.f32 %v49, %v56
  %v72 = vmul.f32 %v50, %v56
  %v73 = vmul.f32 %v51, %v56
  %v75 = vlaneseq
  %v76 = vshrl.u32 %v75, 7
  %v77 = vsub.s32 0, %v76
  %v78 = vrot.slane %v35, %v77
  %v80 = vadd.f32 %v58, %v78
  %v81 = vadd.f32 %v59, %v78
  %v82 = vadd.f32 %v60, %v78
  %v83 = vadd.f32 %v61, %v78
  %v84 = vadd.f32 %v62, %v78
  %v85 = vadd.f32 %v63, %v78
  %v86 = vadd.f32 %v64, %v78
  %v87 = vadd.f32 %v65, %v78
  %v88 = vadd.f32 %v66, %v78
  %v89 = vadd.f32 %v67, %v78
  %v90 = vadd.f32 %v68, %v78
  %v91 = vadd.f32 %v69, %v78
  %v92 = vadd.f32 %v70, %v78
  %v93 = vadd.f32 %v71, %v78
  %v94 = vadd.f32 %v72, %v78
  %v95 = vadd.f32 %v73, %v78
  %vm96 = vcmp.gt.f32.partialorder %v80, 0.0
  %vm97 = vcmp.gt.f32.partialorder %v81, 0.0
  %vm98 = vcmp.gt.f32.partialorder %v82, 0.0
  %vm99 = vcmp.gt.f32.partialorder %v83, 0.0
  %vm100 = vcmp.gt.f32.partialorder %v84, 0.0
  %vm101 = vcmp.gt.f32.partialorder %v85, 0.0
  %vm102 = vcmp.gt.f32.partialorder %v86, 0.0
  %vm103 = vcmp.gt.f32.partialorder %v87, 0.0
  %vm104 = vcmp.gt.f32.partialorder %v88, 0.0
  %vm105 = vcmp.gt.f32.partialorder %v89, 0.0
  %vm106 = vcmp.gt.f32.partialorder %v90, 0.0
  %vm107 = vcmp.gt.f32.partialorder %v91, 0.0
  %vm108 = vcmp.gt.f32.partialorder %v92, 0.0
  %vm109 = vcmp.gt.f32.partialorder %v93, 0.0
  %vm110 = vcmp.gt.f32.partialorder %v94, 0.0
  %vm111 = vcmp.gt.f32.partialorder %v95, 0.0
  %v112 = vmul.f32 %v80, 0.2
  %v113 = vmul.f32 %v81, 0.2
  %v114 = vmul.f32 %v82, 0.2
  %v115 = vmul.f32 %v83, 0.2
  %v116 = vmul.f32 %v84, 0.2
  %v117 = vmul.f32 %v85, 0.2
  %v118 = vmul.f32 %v86, 0.2
  %v119 = vmul.f32 %v87, 0.2
  %v120 = vmul.f32 %v88, 0.2
  %v121 = vmul.f32 %v89, 0.2
  %v122 = vmul.f32 %v90, 0.2
  %v123 = vmul.f32 %v91, 0.2
  %v124 = vmul.f32 %v92, 0.2
  %v125 = vmul.f32 %v93, 0.2
  %v126 = vmul.f32 %v94, 0.2
  %v127 = vmul.f32 %v95, 0.2
  %v128 = vsel %vm96, %v80, %v112
  %v129 = vsel %vm97, %v81, %v113
  %v130 = vsel %vm98, %v82, %v114
  %v131 = vsel %vm99, %v83, %v115
  %v132 = vsel %vm100, %v84, %v116
  %v133 = vsel %vm101, %v85, %v117
  %v134 = vsel %vm102, %v86, %v118
  %v135 = vsel %vm103, %v87, %v119
  %v136 = vsel %vm104, %v88, %v120
  %v137 = vsel %vm105, %v89, %v121
  %v138 = vsel %vm106, %v90, %v122
  %v139 = vsel %vm107, %v91, %v123
  %v140 = vsel %vm108, %v92, %v124
  %v141 = vsel %vm109, %v93, %v125
  %v142 = vsel %vm110, %v94, %v126
  %v143 = vsel %vm111, %v95, %v127
  %144 = vst [vmem:[%s5] sm:$0xff] %v128
  %145 = vst [vmem:[%s5 + $0x8] sm:$0xff] %v129
  %146 = vst [vmem:[%s5 + $0x10] sm:$0xff] %v130
  %147 = vst [vmem:[%s5 + $0x18] sm:$0xff] %v131
  %148 = vst [vmem:[%s5 + $0x20] sm:$0xff] %v132
  %149 = vst [vmem:[%s5 + $0x28] sm:$0xff] %v133
  %150 = vst [vmem:[%s5 + $0x30] sm:$0xff] %v134
  %151 = vst [vmem:[%s5 + $0x38] sm:$0xff] %v135
  %152 = vst [vmem:[%s5 + $0x40] sm:$0xff] %v136
  %153 = vst [vmem:[%s5 + $0x48] sm:$0xff] %v137
  %154 = vst [vmem:[%s5 + $0x50] sm:$0xff] %v138
  %155 = vst [vmem:[%s5 + $0x58] sm:$0xff] %v139
  %156 = vst [vmem:[%s5 + $0x60] sm:$0xff] %v140
  %157 = vst [vmem:[%s5 + $0x68] sm:$0xff] %v141
  %158 = vst [vmem:[%s5 + $0x70] sm:$0xff] %v142
  %159 = vst [vmem:[%s5 + $0x78] sm:$0xff] %v143
  // Predicated region
  $region22: #{unet_down_block.9} parent=0 // pred_check
    _
  $region23: #{unet_down_block.9} parent=0 // pred_check_branch
    %161 = sbr.rel (0) target = $region25
  $region24: #{unet_down_block.9} parent=0 // pred_region
    _
  $region25: #{unet_down_block.9} parent=0 // pred_fallthru
    _
  // Predicated region
  $region26: #{unet_down_block.9} parent=0 // pred_check
    _
  $region27: #{unet_down_block.9} parent=0 // pred_check_branch
    %163 = sbr.rel (0) target = $region29
  $region28: #{unet_down_block.9} parent=0 // pred_region
    _
  $region29: #{unet_down_block.9} parent=0 // pred_fallthru
    _

// kernel: unet_down_block.10
$region0: #{unet_down_block.10}
  #allocation0 [shape = 'u32[]', space=smem, size = 0x4, offset = 0x4, fixed_abs, tag = 'smem constant byte address 0x4 - core index']
  #allocation1 [shape = 'u32[144,128]{1,0:T(1,128)}', space=vmem, size = 0x12000, scoped, tag = 'internal scratch']
  %s0 = inlined_call_operand.vmem [shape: bf16[128,72], index: 0, kind: input, shape index: {}]
  %s1 = inlined_call_operand.vmem [shape: bf16[72,128], index: 1, kind: input, shape index: {}]
  %s2 = inlined_call_operand.vmem [shape: f32[128,128], index: 2, kind: output, shape index: {0}]
  %s3 = inlined_call_operand.vmem [shape: f32[1,1,128], index: 3, kind: output, shape index: {1}]
  %s4 = inlined_call_operand.vmem [shape: f32[1,1,128], index: 4, kind: output, shape index: {2}]
  %5 = xla_tuple %s2, %s3, %s4
  %s6 = sld [smem:[#allocation0]]
  $region34: #{unet_down_block.10} parent=0
    _
  %s8 = ssub.s32 1, %s6
  %s9 = scalar_select 0, %s8, %s6
  // Predicated region
  $region2: #{unet_down_block.10} parent=0 // pred_check
    _
  $region3: #{unet_down_block.10} parent=0 // pred_check_branch
    %11 = sbr.rel (0) target = $region5
  $region4: #{unet_down_block.10} parent=0 // pred_region
    _
  $region5: #{unet_down_block.10} parent=0 // pred_fallthru
    _
  // Predicated region
  $region6: #{unet_down_block.10} parent=0 // pred_check
    _
  $region7: #{unet_down_block.10} parent=0 // pred_check_branch
    %13 = sbr.rel (0) target = $region9
  $region8: #{unet_down_block.10} parent=0 // pred_region
    _
  $region9: #{unet_down_block.10} parent=0 // pred_fallthru
    _
  %v15 = vld [vmem:[%s0] sm:$0xf]
  %v16 = vld [vmem:[%s0 + $0x4] sm:$0xf]
  %v17 = vld [vmem:[%s0 + $0x8] sm:$0xf]
  %v18 = vld [vmem:[%s0 + $0xc] sm:$0xf]
  %v19 = vld [vmem:[%s0 + $0x10] sm:$0xf]
  %v20 = vld [vmem:[%s0 + $0x14] sm:$0xf]
  %v21 = vld [vmem:[%s0 + $0x18] sm:$0xf]
  %v22 = vld [vmem:[%s0 + $0x1c] sm:$0xf]
  %v23 = vld [vmem:[%s0 + $0x20] sm:$0xf]
  %v24 = vld [vmem:[%s0 + $0x24] sm:$0xf]
  %v25 = vld [vmem:[%s0 + $0x28] sm:$0xf]
  %v26 = vld [vmem:[%s0 + $0x2c] sm:$0xf]
  %v27 = vld [vmem:[%s0 + $0x30] sm:$0xf]
  %v28 = vld [vmem:[%s0 + $0x34] sm:$0xf]
  %v29 = vld [vmem:[%s0 + $0x38] sm:$0xf]
  %v30 = vld [vmem:[%s0 + $0x3c] sm:$0xf]
  %v31 = vld [vmem:[%s1] sm:$0xf]
  %v32 = vld [vmem:[%s1 + $0x4] sm:$0xf]
  %v33 = vld [vmem:[%s1 + $0x8] sm:$0xf]
  %v34 = vld [vmem:[%s1 + $0xc] sm:$0xf]
  %v35 = vld [vmem:[%s1 + $0x10] sm:$0xf]
  %v36 = vld [vmem:[%s1 + $0x14] sm:$0xf]
  %v37 = vld [vmem:[%s1 + $0x18] sm:$0xf]
  %v38 = vld [vmem:[%s1 + $0x1c] sm:$0xf]
  %v39 = vld [vmem:[%s1 + $0x20] sm:$0xf]
  %v56 = vunpack.c.l.b16 %v15
  %v57 = vunpack.c.l.b16 %v16
  %v58 = vunpack.c.l.b16 %v17
  %v59 = vunpack.c.l.b16 %v18
  %v60 = vunpack.c.l.b16 %v19
  %v61 = vunpack.c.l.b16 %v20
  %v62 = vunpack.c.l.b16 %v21
  %v63 = vunpack.c.l.b16 %v22
  %v64 = vunpack.c.l.b16 %v23
  %v65 = vunpack.c.l.b16 %v24
  %v66 = vunpack.c.l.b16 %v25
  %v67 = vunpack.c.l.b16 %v26
  %v68 = vunpack.c.l.b16 %v27
  %v69 = vunpack.c.l.b16 %v28
  %v70 = vunpack.c.l.b16 %v29
  %v71 = vunpack.c.l.b16 %v30
  %v72 = vpack.c.b16 %v57, %v56
  %v73 = vpack.c.b16 %v59, %v58
  %v74 = vpack.c.b16 %v61, %v60
  %v75 = vpack.c.b16 %v63, %v62
  %v76 = vpack.c.b16 %v65, %v64
  %v77 = vpack.c.b16 %v67, %v66
  %v78 = vpack.c.b16 %v69, %v68
  %v79 = vpack.c.b16 %v71, %v70
  %v89 = vunpack.c.l.b16 %v31
  %v90 = vunpack.c.l.b16 %v32
  %v91 = vunpack.c.l.b16 %v33
  %v92 = vunpack.c.l.b16 %v34
  %v93 = vunpack.c.l.b16 %v35
  %v94 = vunpack.c.l.b16 %v36
  %v95 = vunpack.c.l.b16 %v37
  %v96 = vunpack.c.l.b16 %v38
  %v97 = vunpack.c.l.b16 %v39
  %v98 = vpack.c.b16 %v90, %v89
  %v99 = vpack.c.b16 %v92, %v91
  %v100 = vpack.c.b16 %v94, %v93
  %v101 = vpack.c.b16 %v96, %v95
  %v102 = vpack.c.b16 %v97, %v97
  %vm107 = vcmask 588800
  %v109 = vsel %vm107, %v72, 0
  %v112 = vsel %vm107, %v73, 0
  %v115 = vsel %vm107, %v74, 0
  %v118 = vsel %vm107, %v75, 0
  %v121 = vsel %vm107, %v76, 0
  %v124 = vsel %vm107, %v77, 0
  %v127 = vsel %vm107, %v78, 0
  %v130 = vsel %vm107, %v79, 0
  %vm132 = vcmask 1043456
  %v134 = vsel %vm132, %v102, 0
  %136 = vmatprep.subr.bf16.mxu0 0
  %137 = vmatpush1.bf16.msra.mxu0 %v98
  %138 = vmatprep.subr.bf16.mxu0 0
  %139 = vmatpush1.bf16.msra.mxu0 %v99
  %140 = vmatprep.subr.bf16.mxu0 0
  %141 = vmatpush1.bf16.msra.mxu0 %v100
  %142 = vmatprep.subr.bf16.mxu0 0
  %143 = vmatpush1.bf16.msra.mxu0 %v101
  %144 = vmatprep.subr.bf16.mxu0 0
  %145 = vmatpush1.bf16.msra.mxu0 %v134
  %146 = vmatprep.subr.bf16.mxu0 0
  %147 = vmatpush1.bf16.msra.mxu0 0
  %148 = vmatprep.subr.bf16.mxu0 0
  %149 = vmatpush1.bf16.msra.mxu0 0
  %150 = vmatprep.subr.bf16.mxu0 0
  %151 = vmatpush1.bf16.msra.mxu0 0
  %152 = vmatprep.subr.bf16.mxu0 0
  %153 = vmatpush1.bf16.msra.mxu0 0
  %154 = vmatprep.subr.bf16.mxu0 0
  %155 = vmatpush1.bf16.msra.mxu0 0
  %156 = vmatprep.subr.bf16.mxu0 0
  %157 = vmatpush1.bf16.msra.mxu0 0
  %158 = vmatprep.subr.bf16.mxu0 0
  %159 = vmatpush1.bf16.msra.mxu0 0
  %160 = vmatprep.subr.bf16.mxu0 0
  %161 = vmatpush1.bf16.msra.mxu0 0
  %162 = vmatprep.subr.bf16.mxu0 0
  %163 = vmatpush1.bf16.msra.mxu0 0
  %164 = vmatprep.subr.bf16.mxu0 0
  %165 = vmatpush1.bf16.msra.mxu0 0
  %166 = vmatprep.subr.bf16.mxu0 0
  %167 = vmatpush1.bf16.msra.mxu0 0
  %168 = vmatprep.mubr.bf16.mxu0 0
  %169 = vmatmul.mubr.bf16.gmra.mrb[0].mxu0 %v109
  %v170 = vpop.f32.mrb[0].mxu0
  %v171 = vadd.f32 0.0, %v170
  %v172 = vpop.f32.mrb[0].mxu0
  %v173 = vpop.f32.mrb[0].mxu0
  %v174 = vadd.f32 0.0, %v173
  %v175 = vpop.f32.mrb[0].mxu0
  %176 = vmatprep.mubr.bf16.mxu0 0
  %177 = vmatmul.mubr.bf16.gmra.mrb[0].mxu0 %v112
  %v178 = vpop.f32.mrb[0].mxu0
  %v179 = vadd.f32 0.0, %v178
  %v180 = vpop.f32.mrb[0].mxu0
  %v181 = vpop.f32.mrb[0].mxu0
  %v182 = vadd.f32 0.0, %v181
  %v183 = vpop.f32.mrb[0].mxu0
  %184 = vmatprep.mubr.bf16.mxu0 0
  %185 = vmatmul.mubr.bf16.gmra.mrb[0].mxu0 %v115
  %v186 = vpop.f32.mrb[0].mxu0
  %v187 = vadd.f32 0.0, %v186
  %v188 = vpop.f32.mrb[0].mxu0
  %v189 = vpop.f32.mrb[0].mxu0
  %v190 = vadd.f32 0.0, %v189
  %v191 = vpop.f32.mrb[0].mxu0
  %192 = vmatprep.mubr.bf16.mxu0 0
  %193 = vmatmul.mubr.bf16.gmra.mrb[0].mxu0 %v118
  %v194 = vpop.f32.mrb[0].mxu0
  %v195 = vadd.f32 0.0, %v194
  %v196 = vpop.f32.mrb[0].mxu0
  %v197 = vpop.f32.mrb[0].mxu0
  %v198 = vadd.f32 0.0, %v197
  %v199 = vpop.f32.mrb[0].mxu0
  %200 = vmatprep.mubr.bf16.mxu0 0
  %201 = vmatmul.mubr.bf16.gmra.mrb[0].mxu0 %v121
  %v202 = vpop.f32.mrb[0].mxu0
  %v203 = vadd.f32 0.0, %v202
  %v204 = vpop.f32.mrb[0].mxu0
  %v205 = vpop.f32.mrb[0].mxu0
  %v206 = vadd.f32 0.0, %v205
  %v207 = vpop.f32.mrb[0].mxu0
  %208 = vmatprep.mubr.bf16.mxu0 0
  %209 = vmatmul.mubr.bf16.gmra.mrb[0].mxu0 %v124
  %v210 = vpop.f32.mrb[0].mxu0
  %v211 = vadd.f32 0.0, %v210
  %v212 = vpop.f32.mrb[0].mxu0
  %v213 = vpop.f32.mrb[0].mxu0
  %v214 = vadd.f32 0.0, %v213
  %v215 = vpop.f32.mrb[0].mxu0
  %216 = vmatprep.mubr.bf16.mxu0 0
  %217 = vmatmul.mubr.bf16.gmra.mrb[0].mxu0 %v127
  %v218 = vpop.f32.mrb[0].mxu0
  %v219 = vadd.f32 0.0, %v218
  %v220 = vpop.f32.mrb[0].mxu0
  %v221 = vpop.f32.mrb[0].mxu0
  %v222 = vadd.f32 0.0, %v221
  %v223 = vpop.f32.mrb[0].mxu0
  %224 = vmatprep.mubr.bf16.mxu0 0
  %225 = vmatmul.mubr.bf16.gmra.mrb[0].mxu0 %v130
  %v226 = vpop.f32.mrb[0].mxu0
  %v227 = vadd.f32 0.0, %v226
  %v228 = vpop.f32.mrb[0].mxu0
  %v229 = vpop.f32.mrb[0].mxu0
  %v230 = vadd.f32 0.0, %v229
  %v231 = vpop.f32.mrb[0].mxu0
  %232 = vdwg.mxu0
  %233 = vst [vmem:[%s2] sm:$0xff] %v171
  %234 = vst [vmem:[%s2 + $0x8] sm:$0xff] %v174
  %235 = vst [vmem:[%s2 + $0x10] sm:$0xff] %v179
  %236 = vst [vmem:[%s2 + $0x18] sm:$0xff] %v182
  %237 = vst [vmem:[%s2 + $0x20] sm:$0xff] %v187
  %238 = vst [vmem:[%s2 + $0x28] sm:$0xff] %v190
  %239 = vst [vmem:[%s2 + $0x30] sm:$0xff] %v195
  %240 = vst [vmem:[%s2 + $0x38] sm:$0xff] %v198
  %241 = vst [vmem:[%s2 + $0x40] sm:$0xff] %v203
  %242 = vst [vmem:[%s2 + $0x48] sm:$0xff] %v206
  %243 = vst [vmem:[%s2 + $0x50] sm:$0xff] %v211
  %244 = vst [vmem:[%s2 + $0x58] sm:$0xff] %v214
  %245 = vst [vmem:[%s2 + $0x60] sm:$0xff] %v219
  %246 = vst [vmem:[%s2 + $0x68] sm:$0xff] %v222
  %247 = vst [vmem:[%s2 + $0x70] sm:$0xff] %v227
  %248 = vst [vmem:[%s2 + $0x78] sm:$0xff] %v230
  %v249 = vadd.f32 %v171, %v174
  %v250 = vadd.f32 %v249, %v179
  %v251 = vadd.f32 %v250, %v182
  %v252 = vadd.f32 %v251, %v187
  %v253 = vadd.f32 %v252, %v190
  %v254 = vadd.f32 %v253, %v195
  %v255 = vadd.f32 %v254, %v198
  %v256 = vadd.f32 %v255, %v203
  %v257 = vadd.f32 %v256, %v206
  %v258 = vadd.f32 %v257, %v211
  %v259 = vadd.f32 %v258, %v214
  %v260 = vadd.f32 %v259, %v219
  %v261 = vadd.f32 %v260, %v222
  %v262 = vadd.f32 %v261, %v227
  %v263 = vadd.f32 %v262, %v230
  %v264 = vrot.slane %v263, 4
  %v265 = vadd.f32 %v263, %v264
  %v266 = vrot.slane %v265, 2
  %v267 = vadd.f32 %v265, %v266
  %v268 = vrot.slane %v267, 1
  %v269 = vadd.f32 %v267, %v268
  %270 = vst [vmem:[%s3] sm:$0x1] %v269
  %v271 = vmul.f32 %v171, %v171
  %v272 = vmul.f32 %v174, %v174
  %v273 = vmul.f32 %v179, %v179
  %v274 = vmul.f32 %v182, %v182
  %v275 = vmul.f32 %v187, %v187
  %v276 = vmul.f32 %v190, %v190
  %v277 = vmul.f32 %v195, %v195
  %v278 = vmul.f32 %v198, %v198
  %v279 = vmul.f32 %v203, %v203
  %v280 = vmul.f32 %v206, %v206
  %v281 = vmul.f32 %v211, %v211
  %v282 = vmul.f32 %v214, %v214
  %v283 = vmul.f32 %v219, %v219
  %v284 = vmul.f32 %v222, %v222
  %v285 = vmul.f32 %v227, %v227
  %v286 = vmul.f32 %v230, %v230
  %v287 = vadd.f32 %v271, %v272
  %v288 = vadd.f32 %v287, %v273
  %v289 = vadd.f32 %v288, %v274
  %v290 = vadd.f32 %v289, %v275
  %v291 = vadd.f32 %v290, %v276
  %v292 = vadd.f32 %v291, %v277
  %v293 = vadd.f32 %v292, %v278
  %v294 = vadd.f32 %v293, %v279
  %v295 = vadd.f32 %v294, %v280
  %v296 = vadd.f32 %v295, %v281
  %v297 = vadd.f32 %v296, %v282
  %v298 = vadd.f32 %v297, %v283
  %v299 = vadd.f32 %v298, %v284
  %v300 = vadd.f32 %v299, %v285
  %v301 = vadd.f32 %v300, %v286
  %v302 = vrot.slane %v301, 4
  %v303 = vadd.f32 %v301, %v302
  %v304 = vrot.slane %v303, 2
  %v305 = vadd.f32 %v303, %v304
  %v306 = vrot.slane %v305, 1
  %v307 = vadd.f32 %v305, %v306
  %308 = vst [vmem:[%s4] sm:$0x1] %v307
  // Predicated region
  $region10: #{unet_down_block.10} parent=0 // pred_check
    _
  $region11: #{unet_down_block.10} parent=0 // pred_check_branch
    %310 = sbr.rel (0) target = $region13
  $region12: #{unet_down_block.10} parent=0 // pred_region
    _
  $region13: #{unet_down_block.10} parent=0 // pred_fallthru
    _
  // Predicated region
  $region14: #{unet_down_block.10} parent=0 // pred_check
    _
  $region15: #{unet_down_block.10} parent=0 // pred_check_branch
    %312 = sbr.rel (0) target = $region17
  $region16: #{unet_down_block.10} parent=0 // pred_region
    _
  $region17: #{unet_down_block.10} parent=0 // pred_fallthru
    _
  // Predicated region
  $region18: #{unet_down_block.10} parent=0 // pred_check
    _
  $region19: #{unet_down_block.10} parent=0 // pred_check_branch
    %314 = sbr.rel (0) target = $region21
  $region20: #{unet_down_block.10} parent=0 // pred_region
    _
  $region21: #{unet_down_block.10} parent=0 // pred_fallthru
    _
  // Predicated region
  $region22: #{unet_down_block.10} parent=0 // pred_check
    _
  $region23: #{unet_down_block.10} parent=0 // pred_check_branch
    %316 = sbr.rel (0) target = $region25
  $region24: #{unet_down_block.10} parent=0 // pred_region
    _
  $region25: #{unet_down_block.10} parent=0 // pred_fallthru
    _
  // Predicated region
  $region26: #{unet_down_block.10} parent=0 // pred_check
    _
  $region27: #{unet_down_block.10} parent=0 // pred_check_branch
    %318 = sbr.rel (0) target = $region29
  $region28: #{unet_down_block.10} parent=0 // pred_region
    _
  $region29: #{unet_down_block.10} parent=0 // pred_fallthru
    _
  // Predicated region
  $region30: #{unet_down_block.10} parent=0 // pred_check
    _
  $region31: #{unet_down_block.10} parent=0 // pred_check_branch
    %320 = sbr.rel (0) target = $region33
  $region32: #{unet_down_block.10} parent=0 // pred_region
    _
  $region33: #{unet_down_block.10} parent=0 // pred_fallthru
    _

</llo_original>
